<compile_context>
chip_gen: v5e
topology: v5e:2x2
jax: 0.10.0
libtpu: 0.0.40
codegen_flags: <defaults>
</compile_context>

<pallas_src>
import functools

import jax
import jax.numpy as jnp
from jax.experimental import pallas as pl
from jax.experimental.pallas import tpu as pltpu


def _pick_hw_tiling(hw, q, budget_bytes, chunk):
    """Pick an HW tile (multiple of `chunk`), tile count and padded HW such that the
    double-buffered bf16 mask tile + lane-padded bf16 gt tile stay under budget_bytes."""
    per_lane = 2 * (q * 2 + 2 * 128)            # dbl-buffered: mask col (bf16) + gt col (bf16, lane-padded)
    t_max = max(chunk, (budget_bytes // per_lane) // chunk * chunk)
    n_tiles = max(1, -(-hw // t_max))           # ceil
    t = -(-hw // (n_tiles * chunk)) * chunk     # smallest chunk-multiple covering hw / n_tiles
    return t, n_tiles, t * n_tiles


def _ma_loss_kernel(cls_ref, oh_ref, mask_ref, gt_ref, sumt_ref, valid_ref,
                    out_ref, acc_ref, *, ni, chunk):
    t = pl.program_id(1)
    nq, nr = acc_ref.shape
    thw = mask_ref.shape[2]
    n_chunks = thw // chunk

    @pl.when(t == 0)
    def _():
        acc_ref[...] = jnp.zeros_like(acc_ref)

    # ---- HW-tiled reduction on the MXU, chunked so the sigmoid of the whole tile -----
    # ---- is never materialized in VMEM. -----------------------------------------------
    part = jnp.zeros((nq, nr), jnp.float32)
    for c in range(n_chunks):                                   # static unroll, static slices
        lo = c * chunk
        x = mask_ref[0, :, pl.ds(lo, chunk)].astype(jnp.float32)
        # logistic sigmoid via one EUP op (tanh); f32 compute so it also runs on v5e.
        pred = (0.5 * jnp.tanh(0.5 * x) + 0.5).astype(jnp.bfloat16)
        g = gt_ref[0, pl.ds(lo, chunk), :]                      # (chunk, NR) bf16, values 0/1 (exact)
        part = part + jax.lax.dot_general(
            pred, g, dimension_numbers=(((1,), (0,)), ((), ())),
            preferred_element_type=jnp.float32)                 # canonical (Q,chunk)@(chunk,NR)
    acc_ref[...] += part

    # ---- finalize once per image, on the last HW tile ----------------------------------
    @pl.when(t == pl.num_programs(1) - 1)
    def _():
        dots = acc_ref[...]                                     # (Q, NR) f32
        iand = dots[:, :ni]                                     # (Q, NI)
        sum_p = dots[:, ni:ni + 1]                              # (Q, 1)  from the ones column
        sum_t = sumt_ref[0]                                     # (1, NI)

        # get_iou
        iou = iand / (sum_t + sum_p - iand + 1e-7)              # (Q, NI)

        # mynorm: per-instance min/max normalization over the Q queries
        mn = jnp.min(iou, axis=0, keepdims=True)                # (1, NI)
        mx = jnp.max(iou, axis=0, keepdims=True)
        iou_n = (iou - mn) / (mx - mn + 1e-8)

        # class softmax + per-instance class gather (tiny one-hot matmul -> keep exact)
        cls = cls_ref[0]                                        # (Q, Cm) f32
        cmax = jnp.max(cls, axis=-1, keepdims=True)
        e = jnp.exp(cls - cmax)
        probs = e / jnp.sum(e, axis=-1, keepdims=True)          # (Q, Cm)
        logit = jax.lax.dot_general(
            probs, oh_ref[0],
            dimension_numbers=(((1,), (0,)), ((), ())),
            precision=jax.lax.Precision.HIGHEST,
            preferred_element_type=jnp.float32)                 # (Q, NI)

        # SmoothL1 (beta = 1) masked to real instances; the 'mean' (/(N*Q)) is applied in glue.
        diff = logit - iou_n
        ad = jnp.abs(diff)
        sl1 = jnp.where(ad < 1.0, 0.5 * diff * diff, ad - 0.5)
        out_ref[...] = jnp.sum(sl1 * valid_ref[0]).reshape(1, 1, 1)


def ma_loss_pallas(cls_results, mask_results, gt_masks, labels, *,
                   k_per_batch, vmem_budget_bytes=20 << 20, chunk_target=1024):
    bs, Q, C = cls_results.shape
    _, _, H, W = mask_results.shape
    HW = H * W
    Cm = C - 1                                  # "void" class dropped
    ks = [int(k) for k in k_per_batch]
    N = sum(ks)
    NI = max(8, ((max(ks) + 7) // 8) * 8)       # padded instance count (lane dim of accumulator)
    NR = NI + 1                                 # + appended all-ones column (-> sum over pred)

    chunk = min(max(128, (chunk_target // 128) * 128), -(-HW // 128) * 128)
    tHW, n_tiles, HW_pad = _pick_hw_tiling(HW, Q, vmem_budget_bytes, chunk)

    f32, bf16 = jnp.float32, jnp.bfloat16
    cls_sliced = cls_results[..., :Cm].astype(f32)                  # (bs, Q, Cm)
    masks_flat = mask_results.reshape(bs, Q, HW).astype(bf16)       # (bs, Q, HW) bf16 stream
    if HW_pad != HW:
        masks_flat = jnp.pad(masks_flat, ((0, 0), (0, 0), (0, HW_pad - HW)))
    gt_flat = gt_masks.reshape(N, HW).astype(f32)                   # (N, HW)

    # Per-image, zero-padded operands (static python loop; indices are compile-time).
    # gt is stored transposed (HW_pad, NR) so the hot matmul is canonical (no transpose);
    # padded HW columns are zero in BOTH the gt columns and the ones column.
    gt_t = jnp.zeros((bs, HW_pad, NR), bf16)
    sumt = jnp.zeros((bs, 1, NI), f32)
    valid = jnp.zeros((bs, 1, NI), f32)
    onehot_t = jnp.zeros((bs, Cm, NI), f32)
    off = 0
    for b, k in enumerate(ks):
        gt_b = gt_flat[off:off + k]                                 # (k, HW)
        gt_t = gt_t.at[b, :HW, :k].set(gt_b.T.astype(bf16))         # 0/1 -> exact in bf16
        gt_t = gt_t.at[b, :HW, NI].set(1.0)                         # ones column -> sum(pred)
        sumt = sumt.at[b, 0, :k].set(jnp.sum(gt_b, axis=-1))
        valid = valid.at[b, 0, :k].set(1.0)
        onehot_t = onehot_t.at[b, :, :k].set(
            jax.nn.one_hot(labels[off:off + k], Cm, dtype=f32).T)   # NOTE: assumes labels < C-1
        off += k

    # Explicit VMEM bound: double-buffered streaming tiles + resident blocks + chunk temps.
    est = (2 * Q * tHW * 2            # mask tile, double-buffered (bf16)
           + 2 * tHW * 256            # gt tile, double-buffered (bf16, lane-padded to 128)
           + 2 * Q * 128 * 4          # class scores (f32, lane-padded)
           + 6 * 128 * 128 * 4        # one-hot / sum_t / valid blocks (generous)
           + Q * 128 * 4              # accumulator scratch
           + 4 * Q * chunk * 4        # per-chunk sigmoid temporaries
           + (4 << 20))               # headroom / internal scratch
    vmem_limit = int(min(max(est, 32 << 20), 64 << 20))

    kernel = functools.partial(_ma_loss_kernel, ni=NI, chunk=chunk)
    grid_spec = pltpu.PrefetchScalarGridSpec(
        num_scalar_prefetch=0,
        grid=(bs, n_tiles),
        in_specs=[
            pl.BlockSpec((1, Q, Cm), lambda b, t: (b, 0, 0)),       # class scores (resident per image)
            pl.BlockSpec((1, Cm, NI), lambda b, t: (b, 0, 0)),      # one-hot instance labels^T
            pl.BlockSpec((1, Q, tHW), lambda b, t: (b, 0, t)),      # mask logits (bf16), HW-tiled
            pl.BlockSpec((1, tHW, NR), lambda b, t: (b, t, 0)),     # gt^T + ones col (bf16), HW-tiled
            pl.BlockSpec((1, 1, NI), lambda b, t: (b, 0, 0)),       # per-instance sum(gt)
            pl.BlockSpec((1, 1, NI), lambda b, t: (b, 0, 0)),       # validity mask
        ],
        out_specs=pl.BlockSpec((1, 1, 1), lambda b, t: (b, 0, 0)),
        scratch_shapes=[pltpu.VMEM((Q, NR), jnp.float32)],
    )
    per_image = pl.pallas_call(
        kernel,
        out_shape=jax.ShapeDtypeStruct((bs, 1, 1), jnp.float32),
        grid_spec=grid_spec,
        compiler_params=pltpu.CompilerParams(
            dimension_semantics=("parallel", "arbitrary"),
            vmem_limit_bytes=vmem_limit),
    )(cls_sliced, onehot_t, masks_flat, gt_t, sumt, valid)

    return jnp.sum(per_image) / float(N * Q)


# ---------------- pure-JAX reference (mirrors the PyTorch forward, all f32) ----------------
def ma_loss_ref(cls_results, mask_results, gt_masks, labels, batch_idx):
    probs = jax.nn.softmax(cls_results[..., :-1].astype(jnp.float32), axis=-1)
    pred = jax.nn.sigmoid(mask_results.astype(jnp.float32))
    bs, Q, H, W = mask_results.shape
    N = gt_masks.shape[0]
    pred_i = pred[batch_idx].reshape(N, Q, H * W)
    tgt_i = gt_masks.reshape(N, 1, H * W).astype(jnp.float32)
    iand = jnp.sum(tgt_i * pred_i, axis=-1)
    ior = jnp.sum(tgt_i, axis=-1) + jnp.sum(pred_i, axis=-1) - iand + 1e-7
    iou = iand / ior
    mn = jnp.min(iou, axis=-1, keepdims=True)
    mx = jnp.max(iou, axis=-1, keepdims=True)
    iou_n = (iou - mn) / (mx - mn + 1e-8)
    logits = probs[batch_idx, :, labels]
    diff = logits - iou_n
    ad = jnp.abs(diff)
    sl1 = jnp.where(ad < 1.0, 0.5 * diff * diff, ad - 0.5)
    return jnp.mean(sl1)


if __name__ == "__main__":
    key = jax.random.PRNGKey(0)
    bs, Q, C, H, W = 2, 8, 12, 16, 16          # 12 classes incl. the dropped "void" class
    k_per_batch = (3, 2)                       # ground-truth instances per image
    N = sum(k_per_batch)

    k1, k2, k3, k4 = jax.random.split(key, 4)
    cls_results = jax.random.normal(k1, (bs, Q, C), dtype=jnp.float32)
    mask_results = 2.0 * jax.random.normal(k2, (bs, Q, H, W), dtype=jnp.float32)
    labels = jax.random.randint(k3, (N,), 0, C - 1)
    gt_masks = (jax.random.uniform(k4, (N, H, W)) > 0.5).astype(jnp.float32)
    batch_idx = jnp.array([b for b, k in enumerate(k_per_batch) for _ in range(k)],
                          dtype=jnp.int32)

    loss_fn = jax.jit(functools.partial(ma_loss_pallas, k_per_batch=k_per_batch))
    loss = jax.block_until_ready(loss_fn(cls_results, mask_results, gt_masks, labels))

    ref = ma_loss_ref(cls_results, mask_results, gt_masks, labels, batch_idx)
    # bf16 mask stream + bf16 MXU contraction vs the elementwise f32 reference.
    err = abs(float(loss) - float(ref))
    tol = max(4e-3, 2.5e-2 * abs(float(ref)))
    assert err < tol, (float(loss), float(ref), err)
    print("KERNEL_OK")
</pallas_src>

<mosaic_0001>
module attributes {stable_mosaic.version = 11 : i64} {
  func.func @_ma_loss_kernel(%arg0: i32, %arg1: i32, %arg2: memref<1x8x11xf32, #tpu.memory_space<vmem>>, %arg3: memref<1x11x8xf32, #tpu.memory_space<vmem>>, %arg4: memref<1x8x256xbf16, #tpu.memory_space<vmem>>, %arg5: memref<1x256x9xbf16, #tpu.memory_space<vmem>>, %arg6: memref<1x1x8xf32, #tpu.memory_space<vmem>>, %arg7: memref<1x1x8xf32, #tpu.memory_space<vmem>>, %arg8: memref<1x1x1xf32, #tpu.memory_space<vmem>>, %arg9: memref<8x9xf32, #tpu.memory_space<vmem>>) attributes {dimension_semantics = [#tpu.dimension_semantics<parallel>, #tpu.dimension_semantics<arbitrary>], iteration_bounds = array<i64: 2, 1>, scalar_prefetch = 0 : i64, scratch_operands = 1 : i64, tpu.core_type = #tpu.core_type<tc>, window_params = [{transform_indices = @transform_0, window_bounds = array<i64: 1, 8, 11>}, {transform_indices = @transform_1, window_bounds = array<i64: 1, 11, 8>}, {transform_indices = @transform_2, window_bounds = array<i64: 1, 8, 256>}, {transform_indices = @transform_3, window_bounds = array<i64: 1, 256, 9>}, {transform_indices = @transform_4, window_bounds = array<i64: 1, 1, 8>}, {transform_indices = @transform_5, window_bounds = array<i64: 1, 1, 8>}, {transform_indices = @transform_6, window_bounds = array<i64: 1, 1, 1>}]} {
    %c0_i32 = arith.constant 0 : i32
    %0 = arith.cmpi eq, %arg1, %c0_i32 : i32
    %1 = arith.extui %0 : i1 to i32
    %c0_i32_0 = arith.constant 0 : i32
    %2 = arith.cmpi ne, %1, %c0_i32_0 : i32
    scf.if %2 {
      %cst_16 = arith.constant 0.000000e+00 : f32
      %25 = vector.broadcast %cst_16 : f32 to vector<8x9xf32>
      %c0_17 = arith.constant 0 : index
      %c0_18 = arith.constant 0 : index
      %26 = vector.load %arg9[%c0_17, %c0_18] : memref<8x9xf32, #tpu.memory_space<vmem>>, vector<8x9xf32>
      tpu.vector_store %arg9[%c0_17, %c0_18], %25 {strides = array<i32>} : memref<8x9xf32, #tpu.memory_space<vmem>>, vector<8x9xf32>,
    } else {
    }
    %cst = arith.constant 0.000000e+00 : f32
    %3 = vector.broadcast %cst : f32 to vector<8x9xf32>
    %c0 = arith.constant 0 : index
    %c0_1 = arith.constant 0 : index
    %c0_2 = arith.constant 0 : index
    %4 = vector.load %arg4[%c0, %c0_1, %c0_2] : memref<1x8x256xbf16, #tpu.memory_space<vmem>>, vector<1x8x256xbf16>
    %5 = vector.shape_cast %4 : vector<1x8x256xbf16> to vector<8x256xbf16>
    %6 = arith.extf %5 : vector<8x256xbf16> to vector<8x256xf32>
    %cst_3 = arith.constant 5.000000e-01 : f32
    %7 = vector.broadcast %cst_3 : f32 to vector<8x256xf32>
    %8 = arith.mulf %7, %6 : vector<8x256xf32>
    %9 = math.tanh %8 : vector<8x256xf32>
    %cst_4 = arith.constant 5.000000e-01 : f32
    %10 = vector.broadcast %cst_4 : f32 to vector<8x256xf32>
    %11 = arith.mulf %10, %9 : vector<8x256xf32>
    %cst_5 = arith.constant 5.000000e-01 : f32
    %12 = vector.broadcast %cst_5 : f32 to vector<8x256xf32>
    %13 = arith.addf %11, %12 : vector<8x256xf32>
    %14 = arith.truncf %13 : vector<8x256xf32> to vector<8x256xbf16>
    %c0_6 = arith.constant 0 : index
    %c0_7 = arith.constant 0 : index
    %c0_8 = arith.constant 0 : index
    %15 = vector.load %arg5[%c0_6, %c0_7, %c0_8] : memref<1x256x9xbf16, #tpu.memory_space<vmem>>, vector<1x256x9xbf16>
    %16 = vector.shape_cast %15 : vector<1x256x9xbf16> to vector<256x9xbf16>
    %cst_9 = arith.constant dense<0.000000e+00> : vector<8x9xf32>
    %17 = tpu.matmul %14, %16, %cst_9 {dimension_numbers = #tpu.dot_dimension_numbers<[1], [0], [0], [1], [0, 0, 1, 1], [], []>} : vector<8x256xbf16>, vector<256x9xbf16>, vector<8x9xf32> -> vector<8x9xf32>
    %18 = arith.addf %3, %17 : vector<8x9xf32>
    %c0_10 = arith.constant 0 : index
    %c0_11 = arith.constant 0 : index
    %19 = vector.load %arg9[%c0_10, %c0_11] : memref<8x9xf32, #tpu.memory_space<vmem>>, vector<8x9xf32>
    %20 = arith.addf %19, %18 : vector<8x9xf32>
    %c0_12 = arith.constant 0 : index
    %c0_13 = arith.constant 0 : index
    %21 = vector.load %arg9[%c0_12, %c0_13] : memref<8x9xf32, #tpu.memory_space<vmem>>, vector<8x9xf32>
    tpu.vector_store %arg9[%c0_12, %c0_13], %20 {strides = array<i32>} : memref<8x9xf32, #tpu.memory_space<vmem>>, vector<8x9xf32>,
    %c0_i32_14 = arith.constant 0 : i32
    %22 = arith.cmpi eq, %arg1, %c0_i32_14 : i32
    %23 = arith.extui %22 : i1 to i32
    %c0_i32_15 = arith.constant 0 : i32
    %24 = arith.cmpi ne, %23, %c0_i32_15 : i32
    scf.if %24 {
      %c0_16 = arith.constant 0 : index
      %c0_17 = arith.constant 0 : index
      %25 = vector.load %arg9[%c0_16, %c0_17] : memref<8x9xf32, #tpu.memory_space<vmem>>, vector<8x9xf32>
      %26 = vector.extract_strided_slice %25 {offsets = [0, 0], sizes = [8, 8], strides = [1, 1]} : vector<8x9xf32> to vector<8x8xf32>
      %27 = vector.extract_strided_slice %25 {offsets = [0, 8], sizes = [8, 1], strides = [1, 1]} : vector<8x9xf32> to vector<8x1xf32>
      %c0_18 = arith.constant 0 : index
      %c0_19 = arith.constant 0 : index
      %c0_20 = arith.constant 0 : index
      %28 = vector.load %arg6[%c0_18, %c0_19, %c0_20] : memref<1x1x8xf32, #tpu.memory_space<vmem>>, vector<1x1x8xf32>
      %29 = vector.shape_cast %28 : vector<1x1x8xf32> to vector<1x8xf32>
      %30 = vector.broadcast %29 : vector<1x8xf32> to vector<8x8xf32>
      %31 = vector.broadcast %27 : vector<8x1xf32> to vector<8x8xf32>
      %32 = arith.addf %30, %31 : vector<8x8xf32>
      %33 = arith.subf %32, %26 : vector<8x8xf32>
      %cst_21 = arith.constant 1.000000e-07 : f32
      %34 = vector.broadcast %cst_21 : f32 to vector<8x8xf32>
      %35 = arith.addf %33, %34 : vector<8x8xf32>
      %36 = arith.divf %26, %35 : vector<8x8xf32>
      %cst_22 = arith.constant dense<0x7F800000> : vector<8xf32>
      %37 = vector.multi_reduction <minimumf>, %36, %cst_22 [0] : vector<8x8xf32> to vector<8xf32>
      %38 = vector.shape_cast %37 : vector<8xf32> to vector<1x8xf32>
      %cst_23 = arith.constant dense<0xFF800000> : vector<8xf32>
      %39 = vector.multi_reduction <maximumf>, %36, %cst_23 [0] : vector<8x8xf32> to vector<8xf32>
      %40 = vector.shape_cast %39 : vector<8xf32> to vector<1x8xf32>
      %41 = vector.broadcast %38 : vector<1x8xf32> to vector<8x8xf32>
      %42 = arith.subf %36, %41 : vector<8x8xf32>
      %43 = arith.subf %40, %38 : vector<1x8xf32>
      %cst_24 = arith.constant 9.99999993E-9 : f32
      %44 = vector.broadcast %cst_24 : f32 to vector<1x8xf32>
      %45 = arith.addf %43, %44 : vector<1x8xf32>
      %46 = vector.broadcast %45 : vector<1x8xf32> to vector<8x8xf32>
      %47 = arith.divf %42, %46 : vector<8x8xf32>
      %c0_25 = arith.constant 0 : index
      %c0_26 = arith.constant 0 : index
      %c0_27 = arith.constant 0 : index
      %48 = vector.load %arg2[%c0_25, %c0_26, %c0_27] : memref<1x8x11xf32, #tpu.memory_space<vmem>>, vector<1x8x11xf32>
      %49 = vector.shape_cast %48 : vector<1x8x11xf32> to vector<8x11xf32>
      %cst_28 = arith.constant dense<0xFF800000> : vector<8xf32>
      %50 = vector.multi_reduction <maximumf>, %49, %cst_28 [1] : vector<8x11xf32> to vector<8xf32>
      %51 = vector.shape_cast %50 : vector<8xf32> to vector<8x1xf32>
      %52 = vector.broadcast %51 : vector<8x1xf32> to vector<8x11xf32>
      %53 = arith.subf %49, %52 : vector<8x11xf32>
      %54 = math.exp %53 : vector<8x11xf32>
      %cst_29 = arith.constant dense<0.000000e+00> : vector<8xf32>
      %55 = vector.multi_reduction <add>, %54, %cst_29 [1] : vector<8x11xf32> to vector<8xf32>
      %56 = vector.shape_cast %55 : vector<8xf32> to vector<8x1xf32>
      %57 = vector.broadcast %56 : vector<8x1xf32> to vector<8x11xf32>
      %58 = arith.divf %54, %57 : vector<8x11xf32>
      %c0_30 = arith.constant 0 : index
      %c0_31 = arith.constant 0 : index
      %c0_32 = arith.constant 0 : index
      %59 = vector.load %arg3[%c0_30, %c0_31, %c0_32] : memref<1x11x8xf32, #tpu.memory_space<vmem>>, vector<1x11x8xf32>
      %60 = vector.shape_cast %59 : vector<1x11x8xf32> to vector<11x8xf32>
      %cst_33 = arith.constant dense<0.000000e+00> : vector<8x8xf32>
      %61 = tpu.matmul %58, %60, %cst_33 {dimension_numbers = #tpu.dot_dimension_numbers<[1], [0], [0], [1], [0, 0, 1, 1], [], []>, precision = #tpu.contract_precision<fp32>} : vector<8x11xf32>, vector<11x8xf32>, vector<8x8xf32> -> vector<8x8xf32>
      %62 = arith.subf %61, %47 : vector<8x8xf32>
      %63 = math.absf %62 : vector<8x8xf32>
      %cst_34 = arith.constant 1.000000e+00 : f32
      %64 = vector.broadcast %cst_34 : f32 to vector<8x8xf32>
      %65 = arith.cmpf olt, %63, %64 : vector<8x8xf32>
      %cst_35 = arith.constant 5.000000e-01 : f32
      %66 = vector.broadcast %cst_35 : f32 to vector<8x8xf32>
      %67 = arith.mulf %66, %62 : vector<8x8xf32>
      %68 = arith.mulf %67, %62 : vector<8x8xf32>
      %cst_36 = arith.constant 5.000000e-01 : f32
      %69 = vector.broadcast %cst_36 : f32 to vector<8x8xf32>
      %70 = arith.subf %63, %69 : vector<8x8xf32>
      %71 = arith.select %65, %68, %70 : vector<8x8xi1>, vector<8x8xf32>
      %c0_37 = arith.constant 0 : index
      %c0_38 = arith.constant 0 : index
      %c0_39 = arith.constant 0 : index
      %72 = vector.load %arg7[%c0_37, %c0_38, %c0_39] : memref<1x1x8xf32, #tpu.memory_space<vmem>>, vector<1x1x8xf32>
      %73 = vector.shape_cast %72 : vector<1x1x8xf32> to vector<1x8xf32>
      %74 = vector.broadcast %73 : vector<1x8xf32> to vector<8x8xf32>
      %75 = arith.mulf %71, %74 : vector<8x8xf32>
      %76 = vector.shape_cast %75 : vector<8x8xf32> to vector<1x8x8xf32>
      %cst_40 = arith.constant dense<0.000000e+00> : vector<1xf32>
      %77 = vector.multi_reduction <add>, %76, %cst_40 [1, 2] : vector<1x8x8xf32> to vector<1xf32>
      %78 = vector.shape_cast %77 : vector<1xf32> to vector<1x1x1xf32>
      %79 = vector.extract %78[0, 0, 0] : f32 from vector<1x1x1xf32>
      %80 = vector.broadcast %79 : f32 to vector<1x1x1xf32>
      %c0_41 = arith.constant 0 : index
      %c0_42 = arith.constant 0 : index
      %c0_43 = arith.constant 0 : index
      %81 = vector.load %arg8[%c0_41, %c0_42, %c0_43] : memref<1x1x1xf32, #tpu.memory_space<vmem>>, vector<1x1x1xf32>
      tpu.vector_store %arg8[%c0_41, %c0_42, %c0_43], %80 {strides = array<i32>} : memref<1x1x1xf32, #tpu.memory_space<vmem>>, vector<1x1x1xf32>,
    } else {
    }
    return
  }
  func.func @transform_0(%arg0: i32, %arg1: i32) -> (i32, i32, i32) {
    %c0_i32 = arith.constant 0 : i32
    %c0_i32_0 = arith.constant 0 : i32
    %c0_i32_1 = arith.constant 0 : i32
    return %arg0, %c0_i32, %c0_i32_0 : i32, i32, i32
  }
  func.func @transform_1(%arg0: i32, %arg1: i32) -> (i32, i32, i32) {
    %c0_i32 = arith.constant 0 : i32
    %c0_i32_0 = arith.constant 0 : i32
    %c0_i32_1 = arith.constant 0 : i32
    return %arg0, %c0_i32, %c0_i32_0 : i32, i32, i32
  }
  func.func @transform_2(%arg0: i32, %arg1: i32) -> (i32, i32, i32) {
    %c0_i32 = arith.constant 0 : i32
    %c0_i32_0 = arith.constant 0 : i32
    return %arg0, %c0_i32, %arg1 : i32, i32, i32
  }
  func.func @transform_3(%arg0: i32, %arg1: i32) -> (i32, i32, i32) {
    %c0_i32 = arith.constant 0 : i32
    %c0_i32_0 = arith.constant 0 : i32
    return %arg0, %arg1, %c0_i32 : i32, i32, i32
  }
  func.func @transform_4(%arg0: i32, %arg1: i32) -> (i32, i32, i32) {
    %c0_i32 = arith.constant 0 : i32
    %c0_i32_0 = arith.constant 0 : i32
    %c0_i32_1 = arith.constant 0 : i32
    return %arg0, %c0_i32, %c0_i32_0 : i32, i32, i32
  }
  func.func @transform_5(%arg0: i32, %arg1: i32) -> (i32, i32, i32) {
    %c0_i32 = arith.constant 0 : i32
    %c0_i32_0 = arith.constant 0 : i32
    %c0_i32_1 = arith.constant 0 : i32
    return %arg0, %c0_i32, %c0_i32_0 : i32, i32, i32
  }
  func.func @transform_6(%arg0: i32, %arg1: i32) -> (i32, i32, i32) {
    %c0_i32 = arith.constant 0 : i32
    %c0_i32_0 = arith.constant 0 : i32
    %c0_i32_1 = arith.constant 0 : i32
    return %arg0, %c0_i32, %c0_i32_0 : i32, i32, i32
  }
}

</mosaic_0001>

<llo_original>
// kernel: ma_loss_pallas.1
$region0: #{ma_loss_pallas.1}
  #allocation0 [shape = 'u32[]', space=smem, size = 0x4, offset = 0x4, fixed_abs, tag = 'smem constant byte address 0x4 - core index']
  #allocation1 [shape = 'u32[72,128]{1,0:T(1,128)}', space=vmem, size = 0x9000, scoped, tag = 'internal scratch']
  #allocation2 [shape = 'f32[8,9]{1,0:T(8,128)}', space=vmem, size = 0x1000, scoped, tag = 'scratch operand']
  %s0 = inlined_call_operand.vmem [shape: f32[2,8,11], index: 0, kind: input, shape index: {}]
  %s1 = inlined_call_operand.vmem [shape: f32[2,11,8], index: 1, kind: input, shape index: {}]
  %s2 = inlined_call_operand.vmem [shape: bf16[2,8,256], index: 2, kind: input, shape index: {}]
  %s3 = inlined_call_operand.vmem [shape: bf16[2,256,9], index: 3, kind: input, shape index: {}]
  %s4 = inlined_call_operand.vmem [shape: f32[2,1,8], index: 4, kind: input, shape index: {}]
  %s5 = inlined_call_operand.vmem [shape: f32[2,1,8], index: 5, kind: input, shape index: {}]
  %s6 = inlined_call_operand.vmem [shape: f32[2,1,1], index: 6, kind: output, shape index: {}]
  %s7 = sld [smem:[#allocation0]]
  $region65: #{ma_loss_pallas.1} parent=0
    _
  %s9 = ssub.s32 1, %s7
  %s10 = scalar_select 0, %s9, %s7
  loop: start=0, step=1, limit=4
  $region2: #{ma_loss_pallas.1} parent=0 // loop_pre_header
    _
  $region3: #{ma_loss_pallas.1} parent=0 // loop_header
    %s12 = sphi 0, %s16
    %p13 = scmp.ge.s32.totalorder %s12, 4
    %s19 = sphi 0, %s31
    %s20 = sphi 0, %s27
    %s21 = sphi 0, %s19
    %s22 = sphi 0, %s20
    %s23 = sphi 0, %s21
    %s24 = sphi 0, %s22
    %s34 = sphi 0, %s36
    %s37 = sphi 0, %s34
    %s38 = sphi 0, %s37
    %s54 = sphi 0, %s38
    %s60 = sphi 0, %s62
    %s63 = sphi 0, %s60
    %s64 = sphi 0, %s63
    %s80 = sphi 0, %s64
    %s88 = sphi 0, %s90
    %s91 = sphi 0, %s88
    %s92 = sphi 0, %s91
    %s108 = sphi 0, %s92
    %s116 = sphi 0, %s118
    %s119 = sphi 0, %s116
    %s120 = sphi 0, %s119
    %s136 = sphi 0, %s120
    %s142 = sphi 0, %s144
    %s145 = sphi 0, %s142
    %s146 = sphi 0, %s145
    %s162 = sphi 0, %s146
    %s168 = sphi 0, %s170
    %s171 = sphi 0, %s168
    %s172 = sphi 0, %s171
    %s188 = sphi 0, %s172
    %s194 = sphi 0, %s196
    %s197 = sphi 0, %s194
    %s198 = sphi 0, %s197
    %s214 = sphi 0, %s198
  $region4: #{ma_loss_pallas.1} parent=0 // loop_header_branch
    %15 = sbr.rel (%p13) target = $region8
  $region5: #{ma_loss_pallas.1} parent=0 // loop_body
    %s17 = ssub.s32 %s12, 1
    %s18 = ssub.s32 %s12, 2
    %s25 = sadd.s32 1, %s20
    %p26 = scmp.ge.s32.totalorder %s25, 1
    %s27 = scalar_select %p26, 0, %s25
    %s28 = sadd.s32 1, %s19
    %s29 = scalar_select %p26, %s28, %s19
    %p30 = scmp.ge.s32.totalorder %s29, 2
    %s31 = scalar_select %p30, 0, %s29
    %s32 = ssub.s32 %s19, %s31
    %p33 = scmp.eq.s32.totalorder %s32, 0
    %s35 = sadd.s32 %s34, 1
    %s36 = scalar_select %p33, %s34, %s35
    %p39 = pneg %p33
    %p40 = scmp.eq.s32.totalorder %s12, 1
    %p41 = por %p39, %p40
    %p42 = scmp.ne.s32.totalorder %s34, %s37
    %p43 = scmp.eq.s32.totalorder %s12, 0
    %p44 = por %p42, %p43
    %p45 = scmp.ne.s32.totalorder %s34, %s37
    %p46 = scmp.eq.s32.totalorder %s17, 1
    %p47 = por %p45, %p46
    %p48 = scmp.ne.s32.totalorder %s37, %s38
    %p49 = scmp.eq.s32.totalorder %s17, 0
    %p50 = por %p48, %p49
    %p51 = scmp.ne.s32.totalorder %s37, %s38
    %p52 = scmp.eq.s32.totalorder %s18, 1
    %p53 = por %p51, %p52
    %p55 = scmp.ne.s32.totalorder %s38, %s54
    %p56 = scmp.eq.s32.totalorder %s18, 0
    %p57 = por %p55, %p56
    %s58 = ssub.s32 %s19, %s31
    %p59 = scmp.eq.s32.totalorder %s58, 0
    %s61 = sadd.s32 %s60, 1
    %s62 = scalar_select %p59, %s60, %s61
    %p65 = pneg %p59
    %p66 = scmp.eq.s32.totalorder %s12, 1
    %p67 = por %p65, %p66
    %p68 = scmp.ne.s32.totalorder %s60, %s63
    %p69 = scmp.eq.s32.totalorder %s12, 0
    %p70 = por %p68, %p69
    %p71 = scmp.ne.s32.totalorder %s60, %s63
    %p72 = scmp.eq.s32.totalorder %s17, 1
    %p73 = por %p71, %p72
    %p74 = scmp.ne.s32.totalorder %s63, %s64
    %p75 = scmp.eq.s32.totalorder %s17, 0
    %p76 = por %p74, %p75
    %p77 = scmp.ne.s32.totalorder %s63, %s64
    %p78 = scmp.eq.s32.totalorder %s18, 1
    %p79 = por %p77, %p78
    %p81 = scmp.ne.s32.totalorder %s64, %s80
    %p82 = scmp.eq.s32.totalorder %s18, 0
    %p83 = por %p81, %p82
    %s84 = ssub.s32 %s19, %s31
    %s85 = ssub.s32 %s20, %s27
    %s86 = sor.u32 %s84, %s85
    %p87 = scmp.eq.s32.totalorder %s86, 0
    %s89 = sadd.s32 %s88, 1
    %s90 = scalar_select %p87, %s88, %s89
    %p93 = pneg %p87
    %p94 = scmp.eq.s32.totalorder %s12, 1
    %p95 = por %p93, %p94
    %p96 = scmp.ne.s32.totalorder %s88, %s91
    %p97 = scmp.eq.s32.totalorder %s12, 0
    %p98 = por %p96, %p97
    %p99 = scmp.ne.s32.totalorder %s88, %s91
    %p100 = scmp.eq.s32.totalorder %s17, 1
    %p101 = por %p99, %p100
    %p102 = scmp.ne.s32.totalorder %s91, %s92
    %p103 = scmp.eq.s32.totalorder %s17, 0
    %p104 = por %p102, %p103
    %p105 = scmp.ne.s32.totalorder %s91, %s92
    %p106 = scmp.eq.s32.totalorder %s18, 1
    %p107 = por %p105, %p106
    %p109 = scmp.ne.s32.totalorder %s92, %s108
    %p110 = scmp.eq.s32.totalorder %s18, 0
    %p111 = por %p109, %p110
    %s112 = ssub.s32 %s19, %s31
    %s113 = ssub.s32 %s20, %s27
    %s114 = sor.u32 %s112, %s113
    %p115 = scmp.eq.s32.totalorder %s114, 0
    %s117 = sadd.s32 %s116, 1
    %s118 = scalar_select %p115, %s116, %s117
    %p121 = pneg %p115
    %p122 = scmp.eq.s32.totalorder %s12, 1
    %p123 = por %p121, %p122
    %p124 = scmp.ne.s32.totalorder %s116, %s119
    %p125 = scmp.eq.s32.totalorder %s12, 0
    %p126 = por %p124, %p125
    %p127 = scmp.ne.s32.totalorder %s116, %s119
    %p128 = scmp.eq.s32.totalorder %s17, 1
    %p129 = por %p127, %p128
    %p130 = scmp.ne.s32.totalorder %s119, %s120
    %p131 = scmp.eq.s32.totalorder %s17, 0
    %p132 = por %p130, %p131
    %p133 = scmp.ne.s32.totalorder %s119, %s120
    %p134 = scmp.eq.s32.totalorder %s18, 1
    %p135 = por %p133, %p134
    %p137 = scmp.ne.s32.totalorder %s120, %s136
    %p138 = scmp.eq.s32.totalorder %s18, 0
    %p139 = por %p137, %p138
    %s140 = ssub.s32 %s19, %s31
    %p141 = scmp.eq.s32.totalorder %s140, 0
    %s143 = sadd.s32 %s142, 1
    %s144 = scalar_select %p141, %s142, %s143
    %p147 = pneg %p141
    %p148 = scmp.eq.s32.totalorder %s12, 1
    %p149 = por %p147, %p148
    %p150 = scmp.ne.s32.totalorder %s142, %s145
    %p151 = scmp.eq.s32.totalorder %s12, 0
    %p152 = por %p150, %p151
    %p153 = scmp.ne.s32.totalorder %s142, %s145
    %p154 = scmp.eq.s32.totalorder %s17, 1
    %p155 = por %p153, %p154
    %p156 = scmp.ne.s32.totalorder %s145, %s146
    %p157 = scmp.eq.s32.totalorder %s17, 0
    %p158 = por %p156, %p157
    %p159 = scmp.ne.s32.totalorder %s145, %s146
    %p160 = scmp.eq.s32.totalorder %s18, 1
    %p161 = por %p159, %p160
    %p163 = scmp.ne.s32.totalorder %s146, %s162
    %p164 = scmp.eq.s32.totalorder %s18, 0
    %p165 = por %p163, %p164
    %s166 = ssub.s32 %s19, %s31
    %p167 = scmp.eq.s32.totalorder %s166, 0
    %s169 = sadd.s32 %s168, 1
    %s170 = scalar_select %p167, %s168, %s169
    %p173 = pneg %p167
    %p174 = scmp.eq.s32.totalorder %s12, 1
    %p175 = por %p173, %p174
    %p176 = scmp.ne.s32.totalorder %s168, %s171
    %p177 = scmp.eq.s32.totalorder %s12, 0
    %p178 = por %p176, %p177
    %p179 = scmp.ne.s32.totalorder %s168, %s171
    %p180 = scmp.eq.s32.totalorder %s17, 1
    %p181 = por %p179, %p180
    %p182 = scmp.ne.s32.totalorder %s171, %s172
    %p183 = scmp.eq.s32.totalorder %s17, 0
    %p184 = por %p182, %p183
    %p185 = scmp.ne.s32.totalorder %s171, %s172
    %p186 = scmp.eq.s32.totalorder %s18, 1
    %p187 = por %p185, %p186
    %p189 = scmp.ne.s32.totalorder %s172, %s188
    %p190 = scmp.eq.s32.totalorder %s18, 0
    %p191 = por %p189, %p190
    %s192 = ssub.s32 %s19, %s31
    %p193 = scmp.eq.s32.totalorder %s192, 0
    %s195 = sadd.s32 %s194, 1
    %s196 = scalar_select %p193, %s194, %s195
    %p199 = pneg %p193
    %p200 = scmp.eq.s32.totalorder %s12, 1
    %p201 = por %p199, %p200
    %p202 = scmp.ne.s32.totalorder %s194, %s197
    %p203 = scmp.eq.s32.totalorder %s12, 0
    %p204 = por %p202, %p203
    %p205 = scmp.ne.s32.totalorder %s194, %s197
    %p206 = scmp.eq.s32.totalorder %s17, 1
    %p207 = por %p205, %p206
    %p208 = scmp.ne.s32.totalorder %s197, %s198
    %p209 = scmp.eq.s32.totalorder %s17, 0
    %p210 = por %p208, %p209
    %p211 = scmp.ne.s32.totalorder %s197, %s198
    %p212 = scmp.eq.s32.totalorder %s18, 1
    %p213 = por %p211, %p212
    %p215 = scmp.ne.s32.totalorder %s198, %s214
    %p216 = scmp.eq.s32.totalorder %s18, 0
    %p217 = por %p215, %p216
    %p218 = scmp.le.s32.totalorder 1, %s12
    %p219 = scmp.lt.s32.totalorder %s12, 3
    %p220 = pnand %p218, %p219
    %p221 = pneg %p220
    // Predicated region
    $region9: #{ma_loss_pallas.1} parent=5 // pred_check
      _
    $region10: #{ma_loss_pallas.1} parent=5 // pred_check_branch
      %223 = sbr.rel (%p220) target = $region12
    $region11: #{ma_loss_pallas.1} parent=5 // pred_region
      %s224 = ssub.s32 %s12, 1
    $region12: #{ma_loss_pallas.1} parent=5 // pred_fallthru
      _
    %p225 = scmp.lt.s32.totalorder %s12, 2
    // Predicated region
    $region13: #{ma_loss_pallas.1} parent=5 // pred_check
      %p226 = pneg %p225
    $region14: #{ma_loss_pallas.1} parent=5 // pred_check_branch
      %228 = sbr.rel (%p226) target = $region16
    $region15: #{ma_loss_pallas.1} parent=5 // pred_region
      // Predicated region
      $region17: #{ma_loss_pallas.1} parent=15 // pred_check
        %p229 = pneg %p44
      $region18: #{ma_loss_pallas.1} parent=15 // pred_check_branch
        %231 = sbr.rel (%p229) target = $region20
      $region19: #{ma_loss_pallas.1} parent=15 // pred_region
        %p232 = scmp.lt.s32.totalorder %s19, 1
        %s233 = scalar_select %p232, %s19, 1
        %s234 = smul.addr %s233, 8
        %s235 = scalar_lea.vmem %s0, %s234
      $region20: #{ma_loss_pallas.1} parent=15 // pred_fallthru
        _
      // Predicated region
      $region21: #{ma_loss_pallas.1} parent=15 // pred_check
        %p236 = pneg %p70
      $region22: #{ma_loss_pallas.1} parent=15 // pred_check_branch
        %238 = sbr.rel (%p236) target = $region24
      $region23: #{ma_loss_pallas.1} parent=15 // pred_region
        %p239 = scmp.lt.s32.totalorder %s19, 1
        %s240 = scalar_select %p239, %s19, 1
        %s241 = smul.addr %s240, 2
        %s242 = smul.addr %s241, 8
        %s243 = scalar_lea.vmem %s1, %s242
      $region24: #{ma_loss_pallas.1} parent=15 // pred_fallthru
        _
      // Predicated region
      $region25: #{ma_loss_pallas.1} parent=15 // pred_check
        %p244 = pneg %p98
      $region26: #{ma_loss_pallas.1} parent=15 // pred_check_branch
        %246 = sbr.rel (%p244) target = $region28
      $region27: #{ma_loss_pallas.1} parent=15 // pred_region
        %s247 = smul.u32 2, %s20
        %p248 = scmp.lt.s32.totalorder %s19, 1
        %s249 = scalar_select %p248, %s19, 1
        %p250 = scmp.lt.s32.totalorder %s247, 1
        %s251 = scalar_select %p250, %s247, 1
        %s252 = smul.addr %s249, 2
        %s253 = sadd.s32 %s251, %s252
        %s254 = smul.addr %s253, 4
        %s255 = scalar_lea.vmem %s2, %s254
        %s256 = smul.u32 2, %s20
      $region28: #{ma_loss_pallas.1} parent=15 // pred_fallthru
        _
      // Predicated region
      $region29: #{ma_loss_pallas.1} parent=15 // pred_check
        %p257 = pneg %p126
      $region30: #{ma_loss_pallas.1} parent=15 // pred_check_branch
        %259 = sbr.rel (%p257) target = $region32
      $region31: #{ma_loss_pallas.1} parent=15 // pred_region
        %s260 = smul.u32 32, %s20
        %p261 = scmp.lt.s32.totalorder %s19, 1
        %s262 = scalar_select %p261, %s19, 1
        %p263 = scmp.lt.s32.totalorder %s260, 31
        %s264 = scalar_select %p263, %s260, 31
        %s265 = smul.addr %s262, 32
        %s266 = sadd.s32 %s264, %s265
        %s267 = smul.addr %s266, 4
        %s268 = scalar_lea.vmem %s3, %s267
        %s269 = smul.u32 32, %s20
      $region32: #{ma_loss_pallas.1} parent=15 // pred_fallthru
        _
      // Predicated region
      $region33: #{ma_loss_pallas.1} parent=15 // pred_check
        %p270 = pneg %p152
      $region34: #{ma_loss_pallas.1} parent=15 // pred_check_branch
        %272 = sbr.rel (%p270) target = $region36
      $region35: #{ma_loss_pallas.1} parent=15 // pred_region
        %p273 = scmp.lt.s32.totalorder %s19, 1
        %s274 = scalar_select %p273, %s19, 1
        %s275 = scalar_lea.vmem %s4, %s274
      $region36: #{ma_loss_pallas.1} parent=15 // pred_fallthru
        _
      // Predicated region
      $region37: #{ma_loss_pallas.1} parent=15 // pred_check
        %p276 = pneg %p178
      $region38: #{ma_loss_pallas.1} parent=15 // pred_check_branch
        %278 = sbr.rel (%p276) target = $region40
      $region39: #{ma_loss_pallas.1} parent=15 // pred_region
        %p279 = scmp.lt.s32.totalorder %s19, 1
        %s280 = scalar_select %p279, %s19, 1
        %s281 = scalar_lea.vmem %s5, %s280
      $region40: #{ma_loss_pallas.1} parent=15 // pred_fallthru
        _
    $region16: #{ma_loss_pallas.1} parent=5 // pred_fallthru
      _
    %p282 = scmp.le.s32.totalorder 1, %s12
    %p283 = scmp.lt.s32.totalorder %s12, 3
    %p284 = pnand %p282, %p283
    %p285 = pneg %p284
    // Predicated region
    $region41: #{ma_loss_pallas.1} parent=5 // pred_check
      _
    $region42: #{ma_loss_pallas.1} parent=5 // pred_check_branch
      %287 = sbr.rel (%p284) target = $region44
    $region43: #{ma_loss_pallas.1} parent=5 // pred_region
      %s288 = ssub.s32 %s12, 1
      %p289 = scmp.lt.s32.totalorder %s21, 1
      %s290 = scalar_select %p289, %s21, 1
      %s291 = smul.addr %s290, 8
      %s292 = scalar_lea.vmem %s0, %s291
      %p293 = pneg %p50
      %p294 = pneg %p47
      %p295 = scmp.lt.s32.totalorder %s21, 1
      %s296 = scalar_select %p295, %s21, 1
      %s297 = smul.addr %s296, 2
      %s298 = smul.addr %s297, 8
      %s299 = scalar_lea.vmem %s1, %s298
      %p300 = pneg %p76
      %p301 = pneg %p73
      %s302 = smul.u32 2, %s22
      %p303 = scmp.lt.s32.totalorder %s21, 1
      %s304 = scalar_select %p303, %s21, 1
      %p305 = scmp.lt.s32.totalorder %s302, 1
      %s306 = scalar_select %p305, %s302, 1
      %s307 = smul.addr %s304, 2
      %s308 = sadd.s32 %s306, %s307
      %s309 = smul.addr %s308, 4
      %s310 = scalar_lea.vmem %s2, %s309
      %p311 = pneg %p104
      %p312 = pneg %p101
      %s313 = smul.u32 32, %s22
      %p314 = scmp.lt.s32.totalorder %s21, 1
      %s315 = scalar_select %p314, %s21, 1
      %p316 = scmp.lt.s32.totalorder %s313, 31
      %s317 = scalar_select %p316, %s313, 31
      %s318 = smul.addr %s315, 32
      %s319 = sadd.s32 %s317, %s318
      %s320 = smul.addr %s319, 4
      %s321 = scalar_lea.vmem %s3, %s320
      %p322 = pneg %p132
      %p323 = pneg %p129
      %p324 = scmp.lt.s32.totalorder %s21, 1
      %s325 = scalar_select %p324, %s21, 1
      %s326 = scalar_lea.vmem %s4, %s325
      %p327 = pneg %p158
      %p328 = pneg %p155
      %p329 = scmp.lt.s32.totalorder %s21, 1
      %s330 = scalar_select %p329, %s21, 1
      %s331 = scalar_lea.vmem %s5, %s330
      %p332 = pneg %p184
      %p333 = pneg %p181
      %p334 = pneg %p210
      %p335 = pneg %p207
      %p336 = scmp.lt.s32.totalorder %s21, 1
      %s337 = scalar_select %p336, %s21, 1
      %s338 = scalar_lea.vmem %s6, %s337
      %p339 = scmp.lt.s32.totalorder %s21, 1
      %s340 = scalar_select %p339, %s21, 1
      %s341 = smul.addr %s340, 8
      %s342 = scalar_lea.vmem %s0, %s341
      %p343 = scmp.lt.s32.totalorder %s21, 1
      %s344 = scalar_select %p343, %s21, 1
      %s345 = smul.addr %s344, 2
      %s346 = smul.addr %s345, 8
      %s347 = scalar_lea.vmem %s1, %s346
      %s348 = smul.u32 2, %s22
      %p349 = scmp.lt.s32.totalorder %s21, 1
      %s350 = scalar_select %p349, %s21, 1
      %p351 = scmp.lt.s32.totalorder %s348, 1
      %s352 = scalar_select %p351, %s348, 1
      %s353 = smul.addr %s350, 2
      %s354 = sadd.s32 %s352, %s353
      %s355 = smul.addr %s354, 4
      %s356 = scalar_lea.vmem %s2, %s355
      %s357 = smul.u32 2, %s22
      %s358 = smul.u32 32, %s22
      %p359 = scmp.lt.s32.totalorder %s21, 1
      %s360 = scalar_select %p359, %s21, 1
      %p361 = scmp.lt.s32.totalorder %s358, 31
      %s362 = scalar_select %p361, %s358, 31
      %s363 = smul.addr %s360, 32
      %s364 = sadd.s32 %s362, %s363
      %s365 = smul.addr %s364, 4
      %s366 = scalar_lea.vmem %s3, %s365
      %s367 = smul.u32 32, %s22
      %p368 = scmp.lt.s32.totalorder %s21, 1
      %s369 = scalar_select %p368, %s21, 1
      %s370 = scalar_lea.vmem %s4, %s369
      %p371 = scmp.lt.s32.totalorder %s21, 1
      %s372 = scalar_select %p371, %s21, 1
      %s373 = scalar_lea.vmem %s5, %s372
      %p374 = scmp.lt.s32.totalorder %s21, 1
      %s375 = scalar_select %p374, %s21, 1
      %s376 = scalar_lea.vmem %s6, %s375
      %p377 = scmp.eq.s32.totalorder %s22, 0
      // Predicated region
      $region45: #{ma_loss_pallas.1} parent=43 // pred_check
        %p378 = pneg %p377
      $region46: #{ma_loss_pallas.1} parent=43 // pred_check_branch
        %380 = sbr.rel (%p378) target = $region48
      $region47: #{ma_loss_pallas.1} parent=43 // pred_region
        %vm381 = vcmask 72704
        %382 = vst.msk [vmem:[#allocation2] sm:$0xff] %vm381, 0.0
      $region48: #{ma_loss_pallas.1} parent=43 // pred_fallthru
        _
      %v383 = vld [vmem:[%s356] sm:$0xff]
      %v384 = vunpack.c.l.bf16 %v383
      %v385 = vunpack.c.h.bf16 %v383
      %v386 = vmul.f32 %v384, 0.5
      %v387 = vmul.f32 %v385, 0.5
      %v388 = vtanh.pop %v386
      %v389 = vtanh.pop %v387
      %v390 = vmul.f32 %v388, 0.5
      %v391 = vmul.f32 %v389, 0.5
      %v392 = vadd.f32 %v390, 0.5
      %v393 = vadd.f32 %v391, 0.5
      %v394 = vpack.c.bf16 %v392, %v392
      %v395 = vpack.c.bf16 %v393, %v393
      %v396 = vld [vmem:[%s366] sm:$0xf]
      %v397 = vld [vmem:[%s366 + $0x4] sm:$0xf]
      %v398 = vld [vmem:[%s366 + $0x8] sm:$0xf]
      %v399 = vld [vmem:[%s366 + $0xc] sm:$0xf]
      %v400 = vld [vmem:[%s366 + $0x10] sm:$0xf]
      %v401 = vld [vmem:[%s366 + $0x14] sm:$0xf]
      %v402 = vld [vmem:[%s366 + $0x18] sm:$0xf]
      %v403 = vld [vmem:[%s366 + $0x1c] sm:$0xf]
      %v404 = vld [vmem:[%s366 + $0x20] sm:$0xf]
      %v405 = vld [vmem:[%s366 + $0x24] sm:$0xf]
      %v406 = vld [vmem:[%s366 + $0x28] sm:$0xf]
      %v407 = vld [vmem:[%s366 + $0x2c] sm:$0xf]
      %v408 = vld [vmem:[%s366 + $0x30] sm:$0xf]
      %v409 = vld [vmem:[%s366 + $0x34] sm:$0xf]
      %v410 = vld [vmem:[%s366 + $0x38] sm:$0xf]
      %v411 = vld [vmem:[%s366 + $0x3c] sm:$0xf]
      %v412 = vld [vmem:[%s366 + $0x40] sm:$0xf]
      %v413 = vld [vmem:[%s366 + $0x44] sm:$0xf]
      %v414 = vld [vmem:[%s366 + $0x48] sm:$0xf]
      %v415 = vld [vmem:[%s366 + $0x4c] sm:$0xf]
      %v416 = vld [vmem:[%s366 + $0x50] sm:$0xf]
      %v417 = vld [vmem:[%s366 + $0x54] sm:$0xf]
      %v418 = vld [vmem:[%s366 + $0x58] sm:$0xf]
      %v419 = vld [vmem:[%s366 + $0x5c] sm:$0xf]
      %v420 = vld [vmem:[%s366 + $0x60] sm:$0xf]
      %v421 = vld [vmem:[%s366 + $0x64] sm:$0xf]
      %v422 = vld [vmem:[%s366 + $0x68] sm:$0xf]
      %v423 = vld [vmem:[%s366 + $0x6c] sm:$0xf]
      %v424 = vld [vmem:[%s366 + $0x70] sm:$0xf]
      %v425 = vld [vmem:[%s366 + $0x74] sm:$0xf]
      %v426 = vld [vmem:[%s366 + $0x78] sm:$0xf]
      %v427 = vld [vmem:[%s366 + $0x7c] sm:$0xf]
      %v460 = vunpack.c.l.b16 %v396
      %v461 = vunpack.c.l.b16 %v397
      %v462 = vunpack.c.l.b16 %v398
      %v463 = vunpack.c.l.b16 %v399
      %v464 = vunpack.c.l.b16 %v400
      %v465 = vunpack.c.l.b16 %v401
      %v466 = vunpack.c.l.b16 %v402
      %v467 = vunpack.c.l.b16 %v403
      %v468 = vunpack.c.l.b16 %v404
      %v469 = vunpack.c.l.b16 %v405
      %v470 = vunpack.c.l.b16 %v406
      %v471 = vunpack.c.l.b16 %v407
      %v472 = vunpack.c.l.b16 %v408
      %v473 = vunpack.c.l.b16 %v409
      %v474 = vunpack.c.l.b16 %v410
      %v475 = vunpack.c.l.b16 %v411
      %v476 = vunpack.c.l.b16 %v412
      %v477 = vunpack.c.l.b16 %v413
      %v478 = vunpack.c.l.b16 %v414
      %v479 = vunpack.c.l.b16 %v415
      %v480 = vunpack.c.l.b16 %v416
      %v481 = vunpack.c.l.b16 %v417
      %v482 = vunpack.c.l.b16 %v418
      %v483 = vunpack.c.l.b16 %v419
      %v484 = vunpack.c.l.b16 %v420
      %v485 = vunpack.c.l.b16 %v421
      %v486 = vunpack.c.l.b16 %v422
      %v487 = vunpack.c.l.b16 %v423
      %v488 = vunpack.c.l.b16 %v424
      %v489 = vunpack.c.l.b16 %v425
      %v490 = vunpack.c.l.b16 %v426
      %v491 = vunpack.c.l.b16 %v427
      %v492 = vpack.c.b16 %v461, %v460
      %v493 = vpack.c.b16 %v463, %v462
      %v494 = vpack.c.b16 %v465, %v464
      %v495 = vpack.c.b16 %v467, %v466
      %v496 = vpack.c.b16 %v469, %v468
      %v497 = vpack.c.b16 %v471, %v470
      %v498 = vpack.c.b16 %v473, %v472
      %v499 = vpack.c.b16 %v475, %v474
      %v500 = vpack.c.b16 %v477, %v476
      %v501 = vpack.c.b16 %v479, %v478
      %v502 = vpack.c.b16 %v481, %v480
      %v503 = vpack.c.b16 %v483, %v482
      %v504 = vpack.c.b16 %v485, %v484
      %v505 = vpack.c.b16 %v487, %v486
      %v506 = vpack.c.b16 %v489, %v488
      %v507 = vpack.c.b16 %v491, %v490
      %524 = vmatpush.bf16.msra.mxu0 %v499
      %525 = vmatpush.bf16.msra.mxu0 %v498
      %526 = vmatpush.bf16.msra.mxu0 %v497
      %527 = vmatpush.bf16.msra.mxu0 %v496
      %528 = vmatpush.bf16.msra.mxu0 %v495
      %529 = vmatpush.bf16.msra.mxu0 %v494
      %530 = vmatpush.bf16.msra.mxu0 %v493
      %531 = vmatpush.bf16.msra.mxu0 %v492
      %532 = vmatmul.bf16.gmra.mxu0 %v394
      %v533 = vpop.f32.mrf.mxu0
      %v534 = vadd.f32 0.0, %v533
      %v535 = vpop.f32.mrf.mxu0
      %536 = vdwg.mxu0
      %537 = vmatpush.bf16.msra.mxu0 %v507
      %538 = vmatpush.bf16.msra.mxu0 %v506
      %539 = vmatpush.bf16.msra.mxu0 %v505
      %540 = vmatpush.bf16.msra.mxu0 %v504
      %541 = vmatpush.bf16.msra.mxu0 %v503
      %542 = vmatpush.bf16.msra.mxu0 %v502
      %543 = vmatpush.bf16.msra.mxu0 %v501
      %544 = vmatpush.bf16.msra.mxu0 %v500
      %545 = vmatmul.bf16.gmra.mxu0 %v395
      %v546 = vpop.f32.mrf.mxu0
      %v547 = vadd.f32 %v534, %v546
      %v548 = vpop.f32.mrf.mxu0
      %549 = vdwg.mxu0
      %v550 = vld [vmem:[#allocation2] sm:$0xff]
      %v551 = vadd.f32 %v550, %v547
      %vm552 = vcmask 72704
      %553 = vst.msk [vmem:[#allocation2] sm:$0xff] %vm552, %v551
      // Predicated region
      $region49: #{ma_loss_pallas.1} parent=43 // pred_check
        %p554 = pneg %p377
      $region50: #{ma_loss_pallas.1} parent=43 // pred_check_branch
        %556 = sbr.rel (%p554) target = $region52
      $region51: #{ma_loss_pallas.1} parent=43 // pred_region
        %v557 = vld [vmem:[#allocation2] sm:$0xff]
        %v558 = vld [vmem:[%s370] sm:$0x1]
        %v560 = vperm.slane %v558, 0
        %563 = vset.pattern.permute.xlu0 8
        %564 = vperm.xlu0 %563, %v557
        %v565 = vpop.permute.xlu0 %564
        %v567 = vadd.f32 %v560, %v565
        %v568 = vsub.f32 %v567, %v557
        %v569 = vadd.f32 %v568, 1e-07
        %v570 = vrcp.pop %v569
        %v571 = vmul.f32 %v569, %v570
        %v572 = vsub.f32 1.0, %v571
        %v573 = vmul.f32 %v570, %v572
        %v574 = vadd.f32 %v570, %v573
        %vm575 = vweird.f32 %v569
        %vm576 = vweird.f32 %v570
        %vm577 = vmor %vm575, %vm576
        %v578 = vsel %vm577, %v570, %v574
        %v579 = vand.u32 2147483647, %v569
        %vm580 = vcmp.eq.f32.partialorder %v579, 8.507059e+37
        %v581 = vand.u32 %v569, 2147483648
        %v582 = vor.u32 1.1754944e-38, %v581
        %v583 = vsel %vm580, %v582, %v578
        %v584 = vmul.f32 %v557, %v583
        %vm585 = vcmask 64512
        %v586 = vsel %vm585, %v584, inf
        %v587 = vrot.slane %v586, 4
        %v588 = vmin.f32 %v586, %v587
        %v589 = vrot.slane %v588, 2
        %v590 = vmin.f32 %v588, %v589
        %v591 = vrot.slane %v590, 1
        %v592 = vmin.f32 %v590, %v591
        %v593 = vsel %vm585, %v584, -inf
        %v594 = vrot.slane %v593, 4
        %v595 = vmax.f32 %v593, %v594
        %v596 = vrot.slane %v595, 2
        %v597 = vmax.f32 %v595, %v596
        %v598 = vrot.slane %v597, 1
        %v599 = vmax.f32 %v597, %v598
        %v600 = vsub.f32 %v584, %v592
        %v601 = vsub.f32 %v599, %v592
        %v602 = vadd.f32 %v601, 1e-08
        %v603 = vrcp.pop %v602
        %v604 = vmul.f32 %v602, %v603
        %v605 = vsub.f32 1.0, %v604
        %v606 = vmul.f32 %v603, %v605
        %v607 = vadd.f32 %v603, %v606
        %vm608 = vweird.f32 %v602
        %vm609 = vweird.f32 %v603
        %vm610 = vmor %vm608, %vm609
        %v611 = vsel %vm610, %v603, %v607
        %v612 = vand.u32 2147483647, %v602
        %vm613 = vcmp.eq.f32.partialorder %v612, 8.507059e+37
        %v614 = vand.u32 %v602, 2147483648
        %v615 = vor.u32 1.1754944e-38, %v614
        %v616 = vsel %vm613, %v615, %v611
        %v617 = vmul.f32 %v600, %v616
        %v618 = vld [vmem:[%s342] sm:$0xff]
        %vm619 = vcmask 89088
        %v620 = vsel %vm619, %v618, -inf
        %621 = vmax.xlane.f32.xlu0 %v620
        %v622 = vpop.xlane.xlu0 %621
        %v623 = vsub.f32 %v618, %v622
        %v624 = vmul.f32 %v623, 1.442695
        %v625 = vpow.pop %v624
        %v626 = vsel %vm619, %v625, 0.0
        %627 = vadd.xlane.f32.xlu0 %v626
        %v628 = vpop.xlane.xlu0 %627
        %v629 = vrcp.pop %v628
        %v630 = vmul.f32 %v628, %v629
        %v631 = vsub.f32 1.0, %v630
        %v632 = vmul.f32 %v629, %v631
        %v633 = vadd.f32 %v629, %v632
        %vm634 = vweird.f32 %v628
        %vm635 = vweird.f32 %v629
        %vm636 = vmor %vm634, %vm635
        %v637 = vsel %vm636, %v629, %v633
        %v638 = vand.u32 2147483647, %v628
        %vm639 = vcmp.eq.f32.partialorder %v638, 8.507059e+37
        %v640 = vand.u32 %v628, 2147483648
        %v641 = vor.u32 1.1754944e-38, %v640
        %v642 = vsel %vm639, %v641, %v637
        %v643 = vmul.f32 %v625, %v642
        %v644 = vld [vmem:[%s347] sm:$0xff]
        %v645 = vld [vmem:[%s347 + $0x8] sm:$0x7]
        %v647 = vsel %vm619, %v643, 0
        %vm649 = vcmask 1042432
        %v651 = vsel %vm649, %v645, 0
        %653 = vmatpush.msra.mxu0 0.0
        %654 = vmatpush.msra.mxu0 0.0
        %655 = vmatpush.msra.mxu0 0.0
        %656 = vmatpush.msra.mxu0 0.0
        %657 = vmatpush.msra.mxu0 0.0
        %658 = vmatpush.msra.mxu0 0.0
        %659 = vmatpush.msra.mxu0 0.0
        %660 = vmatpush.msra.mxu0 0.0
        %661 = vmatpush.msra.mxu0 0.0
        %662 = vmatpush.msra.mxu0 0.0
        %663 = vmatpush.msra.mxu0 0.0
        %664 = vmatpush.msra.mxu0 0.0
        %665 = vmatpush.msra.mxu0 0.0
        %666 = vmatpush.msra.mxu0 0.0
        %v667 = vand.u32 %v651, 4294901760
        %668 = vmatpush.msra.mxu0 %v667
        %v669 = vand.u32 %v644, 4294901760
        %670 = vmatpush.msra.mxu0 %v669
        %v671 = vand.u32 %v647, 4294901760
        %v672 = vsub.f32 %v647, %v671
        %v673 = vand.u32 %v672, 4294901760
        %v674 = vsub.f32 %v672, %v673
        %v675 = vand.u32 %v674, 4294901760
        %676 = vmatmul.f32.gmra.mxu0 %v675
        %v677 = vpop.f32.mrf.mxu0
        %v678 = vadd.f32 0.0, %v677
        %679 = vdwg.mxu0
        %680 = vmatpush.msra.mxu0 0.0
        %681 = vmatpush.msra.mxu0 0.0
        %682 = vmatpush.msra.mxu0 0.0
        %683 = vmatpush.msra.mxu0 0.0
        %684 = vmatpush.msra.mxu0 0.0
        %685 = vmatpush.msra.mxu0 0.0
        %686 = vmatpush.msra.mxu0 0.0
        %687 = vmatpush.msra.mxu0 0.0
        %688 = vmatpush.msra.mxu0 0.0
        %689 = vmatpush.msra.mxu0 0.0
        %690 = vmatpush.msra.mxu0 0.0
        %691 = vmatpush.msra.mxu0 0.0
        %692 = vmatpush.msra.mxu0 0.0
        %693 = vmatpush.msra.mxu0 0.0
        %v694 = vand.u32 %v651, 4294901760
        %v695 = vsub.f32 %v651, %v694
        %v696 = vand.u32 %v695, 4294901760
        %v697 = vsub.f32 %v695, %v696
        %v698 = vand.u32 %v697, 4294901760
        %699 = vmatpush.msra.mxu0 %v698
        %v700 = vand.u32 %v644, 4294901760
        %v701 = vsub.f32 %v644, %v700
        %v702 = vand.u32 %v701, 4294901760
        %v703 = vsub.f32 %v701, %v702
        %v704 = vand.u32 %v703, 4294901760
        %705 = vmatpush.msra.mxu0 %v704
        %v706 = vand.u32 %v647, 4294901760
        %707 = vmatmul.f32.gmra.mxu0 %v706
        %v708 = vpop.f32.mrf.mxu0
        %v709 = vadd.f32 %v678, %v708
        %710 = vdwg.mxu0
        %711 = vmatpush.msra.mxu0 0.0
        %712 = vmatpush.msra.mxu0 0.0
        %713 = vmatpush.msra.mxu0 0.0
        %714 = vmatpush.msra.mxu0 0.0
        %715 = vmatpush.msra.mxu0 0.0
        %716 = vmatpush.msra.mxu0 0.0
        %717 = vmatpush.msra.mxu0 0.0
        %718 = vmatpush.msra.mxu0 0.0
        %719 = vmatpush.msra.mxu0 0.0
        %720 = vmatpush.msra.mxu0 0.0
        %721 = vmatpush.msra.mxu0 0.0
        %722 = vmatpush.msra.mxu0 0.0
        %723 = vmatpush.msra.mxu0 0.0
        %724 = vmatpush.msra.mxu0 0.0
        %v725 = vand.u32 %v651, 4294901760
        %v726 = vsub.f32 %v651, %v725
        %727 = vmatpush.msra.mxu0 %v726
        %v728 = vand.u32 %v644, 4294901760
        %v729 = vsub.f32 %v644, %v728
        %730 = vmatpush.msra.mxu0 %v729
        %v731 = vand.u32 %v647, 4294901760
        %v732 = vsub.f32 %v647, %v731
        %733 = vmatmul.f32.gmra.mxu0 %v732
        %v734 = vpop.f32.mrf.mxu0
        %v735 = vadd.f32 %v709, %v734
        %736 = vdwg.mxu0
        %737 = vmatpush.msra.mxu0 0.0
        %738 = vmatpush.msra.mxu0 0.0
        %739 = vmatpush.msra.mxu0 0.0
        %740 = vmatpush.msra.mxu0 0.0
        %741 = vmatpush.msra.mxu0 0.0
        %742 = vmatpush.msra.mxu0 0.0
        %743 = vmatpush.msra.mxu0 0.0
        %744 = vmatpush.msra.mxu0 0.0
        %745 = vmatpush.msra.mxu0 0.0
        %746 = vmatpush.msra.mxu0 0.0
        %747 = vmatpush.msra.mxu0 0.0
        %748 = vmatpush.msra.mxu0 0.0
        %749 = vmatpush.msra.mxu0 0.0
        %750 = vmatpush.msra.mxu0 0.0
        %v751 = vand.u32 %v651, 4294901760
        %752 = vmatpush.msra.mxu0 %v751
        %v753 = vand.u32 %v644, 4294901760
        %754 = vmatpush.msra.mxu0 %v753
        %v755 = vand.u32 %v647, 4294901760
        %v756 = vsub.f32 %v647, %v755
        %v757 = vand.u32 %v756, 4294901760
        %758 = vmatmul.f32.gmra.mxu0 %v757
        %v759 = vpop.f32.mrf.mxu0
        %v760 = vadd.f32 %v735, %v759
        %761 = vdwg.mxu0
        %762 = vmatpush.msra.mxu0 0.0
        %763 = vmatpush.msra.mxu0 0.0
        %764 = vmatpush.msra.mxu0 0.0
        %765 = vmatpush.msra.mxu0 0.0
        %766 = vmatpush.msra.mxu0 0.0
        %767 = vmatpush.msra.mxu0 0.0
        %768 = vmatpush.msra.mxu0 0.0
        %769 = vmatpush.msra.mxu0 0.0
        %770 = vmatpush.msra.mxu0 0.0
        %771 = vmatpush.msra.mxu0 0.0
        %772 = vmatpush.msra.mxu0 0.0
        %773 = vmatpush.msra.mxu0 0.0
        %774 = vmatpush.msra.mxu0 0.0
        %775 = vmatpush.msra.mxu0 0.0
        %v776 = vand.u32 %v651, 4294901760
        %v777 = vsub.f32 %v651, %v776
        %v778 = vand.u32 %v777, 4294901760
        %779 = vmatpush.msra.mxu0 %v778
        %v780 = vand.u32 %v644, 4294901760
        %v781 = vsub.f32 %v644, %v780
        %v782 = vand.u32 %v781, 4294901760
        %783 = vmatpush.msra.mxu0 %v782
        %v784 = vand.u32 %v647, 4294901760
        %785 = vmatmul.f32.gmra.mxu0 %v784
        %v786 = vpop.f32.mrf.mxu0
        %v787 = vadd.f32 %v760, %v786
        %788 = vdwg.mxu0
        %789 = vmatpush.msra.mxu0 0.0
        %790 = vmatpush.msra.mxu0 0.0
        %791 = vmatpush.msra.mxu0 0.0
        %792 = vmatpush.msra.mxu0 0.0
        %793 = vmatpush.msra.mxu0 0.0
        %794 = vmatpush.msra.mxu0 0.0
        %795 = vmatpush.msra.mxu0 0.0
        %796 = vmatpush.msra.mxu0 0.0
        %797 = vmatpush.msra.mxu0 0.0
        %798 = vmatpush.msra.mxu0 0.0
        %799 = vmatpush.msra.mxu0 0.0
        %800 = vmatpush.msra.mxu0 0.0
        %801 = vmatpush.msra.mxu0 0.0
        %802 = vmatpush.msra.mxu0 0.0
        %v803 = vand.u32 %v651, 4294901760
        %804 = vmatpush.msra.mxu0 %v803
        %v805 = vand.u32 %v644, 4294901760
        %806 = vmatpush.msra.mxu0 %v805
        %v807 = vand.u32 %v647, 4294901760
        %808 = vmatmul.f32.gmra.mxu0 %v807
        %v809 = vpop.f32.mrf.mxu0
        %v810 = vadd.f32 %v787, %v809
        %811 = vdwg.mxu0
        %v812 = vsub.f32 %v810, %v617
        %v813 = vand.u32 2147483647, %v812
        %vm814 = vcmp.lt.f32.partialorder %v813, 1.0
        %v815 = vmul.f32 %v812, 0.5
        %v816 = vmul.f32 %v815, %v812
        %v817 = vsub.f32 %v813, 0.5
        %v818 = vsel %vm814, %v816, %v817
        %v819 = vld [vmem:[%s373] sm:$0x1]
        %v821 = vperm.slane %v819, 0
        %v823 = vmul.f32 %v818, %v821
        %v824 = vsel %vm585, %v823, 0.0
        %825 = vadd.xlane.f32.xlu0 %v824
        %v826 = vpop.xlane.xlu0 %825
        %v827 = vrot.slane %v826, 4
        %v828 = vadd.f32 %v826, %v827
        %v829 = vrot.slane %v828, 2
        %v830 = vadd.f32 %v828, %v829
        %v831 = vrot.slane %v830, 1
        %v832 = vadd.f32 %v830, %v831
        %s833 = vtos %v832
        %v834 = vstv %s833
        %vm835 = vcmask 0
        %836 = vst.msk [vmem:[%s376] sm:$0x1] %vm835, %v834
      $region52: #{ma_loss_pallas.1} parent=43 // pred_fallthru
        _
      %p837 = scmp.lt.s32.totalorder %s21, 1
      %s838 = scalar_select %p837, %s21, 1
      %s839 = scalar_lea.vmem %s6, %s838
      // Predicated region
      $region53: #{ma_loss_pallas.1} parent=43 // pred_check
        %p840 = pneg %p207
      $region54: #{ma_loss_pallas.1} parent=43 // pred_check_branch
        %842 = sbr.rel (%p840) target = $region56
      $region55: #{ma_loss_pallas.1} parent=43 // pred_region
        _
      $region56: #{ma_loss_pallas.1} parent=43 // pred_fallthru
        _
    $region44: #{ma_loss_pallas.1} parent=5 // pred_fallthru
      _
    %p843 = scmp.le.s32.totalorder 2, %s12
    // Predicated region
    $region57: #{ma_loss_pallas.1} parent=5 // pred_check
      %p844 = pneg %p843
    $region58: #{ma_loss_pallas.1} parent=5 // pred_check_branch
      %846 = sbr.rel (%p844) target = $region60
    $region59: #{ma_loss_pallas.1} parent=5 // pred_region
      %s847 = ssub.s32 %s12, 2
      // Predicated region
      $region61: #{ma_loss_pallas.1} parent=59 // pred_check
        %p848 = pneg %p213
      $region62: #{ma_loss_pallas.1} parent=59 // pred_check_branch
        %850 = sbr.rel (%p848) target = $region64
      $region63: #{ma_loss_pallas.1} parent=59 // pred_region
        %p851 = scmp.lt.s32.totalorder %s23, 1
        %s852 = scalar_select %p851, %s23, 1
        %s853 = scalar_lea.vmem %s6, %s852
      $region64: #{ma_loss_pallas.1} parent=59 // pred_fallthru
        _
    $region60: #{ma_loss_pallas.1} parent=5 // pred_fallthru
      _
  $region6: #{ma_loss_pallas.1} parent=0 // loop_footer
    %s16 = sadd.s32 1, %s12
  $region7: #{ma_loss_pallas.1} parent=0 // loop_footer_branch
    %11 = sbr.rel target = $region3
  $region8: #{ma_loss_pallas.1} parent=0 // loop_exit
    _

</llo_original>
